<compile_context>
chip_gen: v5e
topology: v5e:2x2
jax: 0.10.0
libtpu: 0.0.40
codegen_flags: <defaults>
</compile_context>

<pallas_src>
import math
import jax
import jax.numpy as jnp
from jax.experimental import pallas as pl
from jax.experimental.pallas import tpu as pltpu


# ----------------------------- kernels --------------------------------------

def _svdconv_two_stage_kernel(x_ref, wl_ref, wr_ref, b_ref, o_ref):
    # x_ref : (1, Cin, thw)  channels-first pixel tile (lane-dense last dim)
    # wl_ref: (rank, Cin)
    # wr_ref: (Cout, rank)
    # b_ref : (Cout, 1) f32
    # o_ref : (1, Cout, thw)
    x = x_ref[0]                                                      # (Cin, thw)
    t = jnp.dot(wl_ref[...], x, preferred_element_type=jnp.float32)  # (rank, thw)
    y = jnp.dot(wr_ref[...], t, preferred_element_type=jnp.float32)  # (Cout, thw)
    o_ref[0] = (y + b_ref[...]).astype(o_ref.dtype)


def _svdconv_fused_kernel(x_ref, w_ref, b_ref, o_ref):
    # W = Wr @ Wl precomputed in the wrapper: one MXU matmul + bias per tile.
    # x_ref: (1, Cin, thw), w_ref: (Cout, Cin), b_ref: (Cout, 1) f32
    y = jnp.dot(w_ref[...], x_ref[0], preferred_element_type=jnp.float32)
    o_ref[0] = (y + b_ref[...]).astype(o_ref.dtype)


# --------------------------- sizing helpers ----------------------------------

def _round_up(v, m):
    return ((v + m - 1) // m) * m


def _vmem_capacity_bytes():
    """Per-core VMEM capacity; conservative fallback (v7x: 64 MiB) if query fails."""
    try:
        info = pltpu.get_tpu_info()
        cap = getattr(info, "vmem_capacity_bytes", None)
        if cap:
            return int(cap)
    except Exception:
        pass
    return 64 * 1024 * 1024


def _should_fuse(cin, cout, rank, itemsize):
    """Roofline-based fusion decision.

    If the factorization isn't actually low-rank, fusing shrinks both weight
    bytes and FLOPs -> always fuse.  Otherwise, fuse whenever the fused
    arithmetic intensity is far below the flops/byte ratio of the slowest
    supported chip (~240 for v5e): the op stays HBM-bound either way, and the
    fused path issues half the MXU pushes and skips the f32 intermediate.
    """
    if rank * (cin + cout) >= cin * cout:
        return True
    fused_intensity = (2.0 * cin * cout) / (itemsize * (cin + cout))
    return fused_intensity <= 0.25 * 240.0


def _pick_pixel_tile(hw, n, cin, cout, rank, itemsize, fuse, budget_bytes,
                     min_steps=8):
    """Largest multiple-of-128 pixel tile fitting an honest VMEM budget.

    Footprint model: double-buffered input/output blocks with channel dims
    rounded up to the sublane granule (8 for f32, 16 for bf16), plus the f32
    temporaries produced inside the kernel.  The tile is then shrunk (never
    below 128) so the grid has a handful of steps for pipeline steady state
    and v7x megacore balance.
    """
    sublane = max(8, (8 * 4) // itemsize)
    cin_p = _round_up(cin, sublane)
    cout_p = _round_up(cout, sublane)
    rank_p = _round_up(rank, sublane)
    per_px = itemsize * 2 * (cin_p + cout_p) + 4 * cout_p   # 2x-buffered io + f32 y
    if not fuse:
        per_px += 4 * rank_p                                # f32 intermediate t
    cap = max(128, (budget_bytes // per_px) // 128 * 128)
    thw = min(cap, _round_up(hw, 128))

    # Ensure >= ~min_steps total grid steps when the data allows it.
    tiles_wanted = -(-min_steps // max(n, 1))               # ceil
    tiles_possible = -(-hw // 128)                          # ceil
    tiles = max(1, min(tiles_wanted, tiles_possible))
    if tiles > 1:
        thw_target = _round_up(-(-hw // tiles), 128)
        thw = max(128, min(thw, thw_target))
    return thw


# ------------------------------ wrapper --------------------------------------

def svd_conv2d_c(x_nchw, left_kernel, right_kernel, bias):
    """Forward pass of SVDConv2dC.

    x_nchw:       (N, Cin, H, W)
    left_kernel:  (rank, Cin, 1, 1)
    right_kernel: (Cout, rank, 1, 1)
    bias:         (Cout,) or None
    returns:      (N, Cout, H, W)
    """
    N, Cin, H, W = x_nchw.shape
    rank = left_kernel.shape[0]
    Cout = right_kernel.shape[0]
    HW = H * W
    itemsize = x_nchw.dtype.itemsize

    # Channels-first flatten: NCHW -> (N, Cin, H*W).  Pure reshape (no
    # transpose, no pad) -> no extra HBM traffic outside the kernel.
    x3 = x_nchw.reshape(N, Cin, HW)

    wl = left_kernel[:, :, 0, 0]     # (rank, Cin)
    wr = right_kernel[:, :, 0, 0]    # (Cout, rank)
    b_col = (bias if bias is not None else jnp.zeros((Cout,), jnp.float32))
    b_col = b_col.astype(jnp.float32).reshape(Cout, 1)

    fuse = _should_fuse(Cin, Cout, rank, itemsize)

    vmem_cap = _vmem_capacity_bytes()
    budget = min(vmem_cap // 2, 48 * 1024 * 1024)           # per-generation budget
    thw = _pick_pixel_tile(HW, N, Cin, Cout, rank, itemsize, fuse, budget)
    grid = (N, pl.cdiv(HW, thw))

    vmem_limit = int(max(16 << 20,
                         min(vmem_cap - (8 << 20), budget + (16 << 20))))
    cparams = pltpu.CompilerParams(
        dimension_semantics=("parallel", "parallel"),
        vmem_limit_bytes=vmem_limit)

    weight_bytes = int((wl.size + wr.size) * wl.dtype.itemsize + b_col.size * 4)
    flops_core = 2 * N * HW * (Cin * Cout if fuse else rank * (Cin + Cout))
    cost = pl.CostEstimate(
        flops=int(flops_core + N * HW * Cout),
        transcendentals=0,
        bytes_accessed=int(itemsize * N * HW * (Cin + Cout) + weight_bytes))

    out_shape = jax.ShapeDtypeStruct((N, Cout, HW), x_nchw.dtype)
    x_spec = pl.BlockSpec((1, Cin, thw), lambda n, p: (n, 0, p))
    o_spec = pl.BlockSpec((1, Cout, thw), lambda n, p: (n, 0, p))

    if fuse:
        w = jnp.dot(wr, wl, preferred_element_type=jnp.float32).astype(x3.dtype)
        out3 = pl.pallas_call(
            _svdconv_fused_kernel,
            out_shape=out_shape,
            grid_spec=pltpu.PrefetchScalarGridSpec(
                num_scalar_prefetch=0,
                grid=grid,
                in_specs=[x_spec,
                          pl.BlockSpec((Cout, Cin), lambda n, p: (0, 0)),
                          pl.BlockSpec((Cout, 1), lambda n, p: (0, 0))],
                out_specs=o_spec),
            compiler_params=cparams,
            cost_estimate=cost,
        )(x3, w, b_col)
    else:
        out3 = pl.pallas_call(
            _svdconv_two_stage_kernel,
            out_shape=out_shape,
            grid_spec=pltpu.PrefetchScalarGridSpec(
                num_scalar_prefetch=0,
                grid=grid,
                in_specs=[x_spec,
                          pl.BlockSpec((rank, Cin), lambda n, p: (0, 0)),
                          pl.BlockSpec((Cout, rank), lambda n, p: (0, 0)),
                          pl.BlockSpec((Cout, 1), lambda n, p: (0, 0))],
                out_specs=o_spec),
            compiler_params=cparams,
            cost_estimate=cost,
        )(x3, wl, wr, b_col)

    return out3.reshape(N, Cout, H, W)


# ------------------------------ test harness ---------------------------------

def _xavier_uniform(key, shape):
    # torch.nn.init.xavier_uniform_ for a conv weight (out, in, kh, kw).
    fan_out = shape[0] * shape[2] * shape[3]
    fan_in = shape[1] * shape[2] * shape[3]
    limit = math.sqrt(6.0 / (fan_in + fan_out))
    return jax.random.uniform(key, shape, jnp.float32, -limit, limit)


def _reference(x_nchw, left_kernel, right_kernel, bias):
    # Pure-JAX reference for the two 1x1 convs (per-pixel matmuls).
    wl = left_kernel[:, :, 0, 0]    # (rank, Cin)
    wr = right_kernel[:, :, 0, 0]   # (Cout, rank)
    t = jnp.einsum('rc,nchw->nrhw', wl, x_nchw)
    o = jnp.einsum('or,nrhw->nohw', wr, t)
    if bias is not None:
        o = o + bias[None, :, None, None]
    return o


if __name__ == "__main__":
    key = jax.random.PRNGKey(0)
    (k_x, k_l, k_r,
     k_x2, k_l2, k_r2, k_b2,
     k_x3, k_l3, k_r3, k_b3) = jax.random.split(key, 11)

    # --- Test 1: primary module shapes (fused path, roofline says HBM-bound). ---
    N, Cin, H, W = 2, 4, 16, 16
    Cout, rank = 8, 2   # rank would come from hp_dict.ranks[name]

    x = jax.random.normal(k_x, (N, Cin, H, W), jnp.float32)
    left_kernel = _xavier_uniform(k_l, (rank, Cin, 1, 1))
    right_kernel = _xavier_uniform(k_r, (Cout, rank, 1, 1))
    bias = jnp.zeros((Cout,), jnp.float32)   # module initializes bias to zeros

    out = jax.block_until_ready(svd_conv2d_c(x, left_kernel, right_kernel, bias))
    ref = _reference(x, left_kernel, right_kernel, bias)
    assert out.shape == (N, Cout, H, W)
    assert jnp.allclose(out, ref, atol=1e-5, rtol=1e-5)

    # --- Test 2: non-multiple-of-128 pixel count -> ragged (OOB-masked) tile,
    # rank not low -> fused-weight path, nonzero bias. ---
    N2, Cin2, H2, W2 = 2, 4, 10, 10
    Cout2, rank2 = 4, 3
    x2 = jax.random.normal(k_x2, (N2, Cin2, H2, W2), jnp.float32)
    lk2 = _xavier_uniform(k_l2, (rank2, Cin2, 1, 1))
    rk2 = _xavier_uniform(k_r2, (Cout2, rank2, 1, 1))
    b2 = 0.1 * jax.random.normal(k_b2, (Cout2,), jnp.float32)

    out2 = jax.block_until_ready(svd_conv2d_c(x2, lk2, rk2, b2))
    ref2 = _reference(x2, lk2, rk2, b2)
    assert out2.shape == (N2, Cout2, H2, W2)
    assert jnp.allclose(out2, ref2, atol=1e-5, rtol=1e-5)

    # --- Test 3: genuinely low-rank, larger channels -> two-stage kernel path. ---
    N3, Cin3, H3, W3 = 2, 256, 16, 16
    Cout3, rank3 = 256, 8
    x3_in = jax.random.normal(k_x3, (N3, Cin3, H3, W3), jnp.float32)
    lk3 = _xavier_uniform(k_l3, (rank3, Cin3, 1, 1))
    rk3 = _xavier_uniform(k_r3, (Cout3, rank3, 1, 1))
    b3 = 0.1 * jax.random.normal(k_b3, (Cout3,), jnp.float32)

    out3 = jax.block_until_ready(svd_conv2d_c(x3_in, lk3, rk3, b3))
    ref3 = _reference(x3_in, lk3, rk3, b3)
    assert out3.shape == (N3, Cout3, H3, W3)
    assert jnp.allclose(out3, ref3, atol=1e-4, rtol=1e-4)

    print("KERNEL_OK")
</pallas_src>

<mosaic_0001>
module attributes {stable_mosaic.version = 11 : i64} {
  func.func @_svdconv_fused_kernel(%arg0: i32, %arg1: i32, %arg2: memref<1x4x128xf32, #tpu.memory_space<vmem>>, %arg3: memref<8x4xf32, #tpu.memory_space<vmem>>, %arg4: memref<8x1xf32, #tpu.memory_space<vmem>>, %arg5: memref<1x8x128xf32, #tpu.memory_space<vmem>>) attributes {dimension_semantics = [#tpu.dimension_semantics<parallel>, #tpu.dimension_semantics<parallel>], iteration_bounds = array<i64: 2, 2>, scalar_prefetch = 0 : i64, scratch_operands = 0 : i64, tpu.core_type = #tpu.core_type<tc>, window_params = [{transform_indices = @transform_0, window_bounds = array<i64: 1, 4, 128>}, {pipeline_mode = #tpu.pipeline_mode<synchronous>, transform_indices = @transform_1, window_bounds = array<i64: 8, 4>}, {pipeline_mode = #tpu.pipeline_mode<synchronous>, transform_indices = @transform_2, window_bounds = array<i64: 8, 1>}, {transform_indices = @transform_3, window_bounds = array<i64: 1, 8, 128>}]} {
    %c0 = arith.constant 0 : index
    %c0_0 = arith.constant 0 : index
    %0 = vector.load %arg3[%c0, %c0_0] : memref<8x4xf32, #tpu.memory_space<vmem>>, vector<8x4xf32>
    %c0_1 = arith.constant 0 : index
    %c0_2 = arith.constant 0 : index
    %c0_3 = arith.constant 0 : index
    %1 = vector.load %arg2[%c0_1, %c0_2, %c0_3] : memref<1x4x128xf32, #tpu.memory_space<vmem>>, vector<1x4x128xf32>
    %2 = vector.shape_cast %1 : vector<1x4x128xf32> to vector<4x128xf32>
    %cst = arith.constant dense<0.000000e+00> : vector<8x128xf32>
    %3 = tpu.matmul %0, %2, %cst {dimension_numbers = #tpu.dot_dimension_numbers<[1], [0], [0], [1], [0, 0, 1, 1], [], []>} : vector<8x4xf32>, vector<4x128xf32>, vector<8x128xf32> -> vector<8x128xf32>
    %c0_4 = arith.constant 0 : index
    %c0_5 = arith.constant 0 : index
    %4 = vector.load %arg4[%c0_4, %c0_5] : memref<8x1xf32, #tpu.memory_space<vmem>>, vector<8x1xf32>
    %5 = vector.broadcast %4 : vector<8x1xf32> to vector<8x128xf32>
    %6 = arith.addf %3, %5 : vector<8x128xf32>
    %c0_6 = arith.constant 0 : index
    %c0_7 = arith.constant 0 : index
    %c0_8 = arith.constant 0 : index
    %7 = vector.load %arg5[%c0_6, %c0_7, %c0_8] : memref<1x8x128xf32, #tpu.memory_space<vmem>>, vector<1x8x128xf32>
    %8 = vector.shape_cast %7 : vector<1x8x128xf32> to vector<8x128xf32>
    %9 = vector.shape_cast %6 : vector<8x128xf32> to vector<1x8x128xf32>
    tpu.vector_store %arg5[%c0_6, %c0_7, %c0_8], %9 {strides = array<i32>} : memref<1x8x128xf32, #tpu.memory_space<vmem>>, vector<1x8x128xf32>,
    return
  }
  func.func @transform_0(%arg0: i32, %arg1: i32) -> (i32, i32, i32) {
    %c0_i32 = arith.constant 0 : i32
    %c0_i32_0 = arith.constant 0 : i32
    return %arg0, %c0_i32, %arg1 : i32, i32, i32
  }
  func.func @transform_1(%arg0: i32, %arg1: i32) -> (i32, i32) {
    %c0_i32 = arith.constant 0 : i32
    %c0_i32_0 = arith.constant 0 : i32
    %c0_i32_1 = arith.constant 0 : i32
    return %c0_i32, %c0_i32_0 : i32, i32
  }
  func.func @transform_2(%arg0: i32, %arg1: i32) -> (i32, i32) {
    %c0_i32 = arith.constant 0 : i32
    %c0_i32_0 = arith.constant 0 : i32
    %c0_i32_1 = arith.constant 0 : i32
    return %c0_i32, %c0_i32_0 : i32, i32
  }
  func.func @transform_3(%arg0: i32, %arg1: i32) -> (i32, i32, i32) {
    %c0_i32 = arith.constant 0 : i32
    %c0_i32_0 = arith.constant 0 : i32
    return %arg0, %c0_i32, %arg1 : i32, i32, i32
  }
}

</mosaic_0001>

<llo_original>
// kernel: tpu_custom_call.1
$region0: #{tpu_custom_call.1}
  #allocation0 [shape = 'u32[]', space=smem, size = 0x4, offset = 0x4, fixed_abs, tag = 'smem constant byte address 0x4 - core index']
  #allocation1 [shape = 'u32[72,128]{1,0:T(1,128)}', space=vmem, size = 0x9000, scoped, tag = 'internal scratch']
  %s0 = inlined_call_operand.vmem [shape: f32[2,4,256], index: 0, kind: input, shape index: {}]
  %s1 = inlined_call_operand.vmem [shape: f32[8,4], index: 1, kind: input, shape index: {}]
  %s2 = inlined_call_operand.vmem [shape: f32[8,1], index: 2, kind: input, shape index: {}]
  %s3 = inlined_call_operand.hbm [shape: f32[2,8,256], index: 3, kind: output, shape index: {}]
  %s4 = sld [smem:[#allocation0]]
  $region45: #{tpu_custom_call.1} parent=0
    _
  %s6 = ssub.s32 1, %s4
  %s7 = scalar_select 0, %s6, %s4
  $region1: #{tpu_custom_call.1} parent=0
    #allocation2 [shape = 'u8[8192]{0}', space=vmem, size = 0x2000, scoped, tag = 'output window, operand 0']
    #allocation3 [shape = 's32[2]{0}', space=sflag, size = 0x8, scoped, tag = 'scoped memory for tpu_custom_call.1']
    %8 = vsyncpa [#allocation3], 0
    %s9 = scalar_lea.sflag [#allocation3], 1
    %10 = vsyncpa %s9, 0
    loop: start=0, step=1, limit=6
    $region2: #{tpu_custom_call.1} parent=1 // loop_pre_header
      _
    $region3: #{tpu_custom_call.1} parent=1 // loop_header
      %s12 = sphi 0, %s16
      %p13 = scmp.ge.s32.totalorder %s12, 6
      %s19 = sphi 0, %s31
      %s20 = sphi 0, %s27
      %s21 = sphi 0, %s19
      %s22 = sphi 0, %s20
      %s23 = sphi 0, %s21
      %s24 = sphi 0, %s22
      %s36 = sphi 0, %s38
      %s39 = sphi 0, %s36
      %s40 = sphi 0, %s39
      %s56 = sphi 0, %s40
      %s60 = sphi 0, %s60
      %s62 = sphi 0, %s60
      %s63 = sphi 0, %s62
      %s77 = sphi 0, %s63
      %s81 = sphi 0, %s81
      %s83 = sphi 0, %s81
      %s84 = sphi 0, %s83
      %s98 = sphi 0, %s84
      %s106 = sphi 0, %s108
      %s109 = sphi 0, %s106
      %s110 = sphi 0, %s109
      %s126 = sphi 0, %s110
    $region4: #{tpu_custom_call.1} parent=1 // loop_header_branch
      %15 = sbr.rel (%p13) target = $region8
    $region5: #{tpu_custom_call.1} parent=1 // loop_body
      %s17 = ssub.s32 %s12, 1
      %s18 = ssub.s32 %s12, 2
      %s25 = sadd.s32 1, %s20
      %p26 = scmp.ge.s32.totalorder %s25, 2
      %s27 = scalar_select %p26, 0, %s25
      %s28 = sadd.s32 1, %s19
      %s29 = scalar_select %p26, %s28, %s19
      %p30 = scmp.ge.s32.totalorder %s29, 2
      %s31 = scalar_select %p30, 0, %s29
      %s32 = ssub.s32 %s19, %s31
      %s33 = ssub.s32 %s20, %s27
      %s34 = sor.u32 %s32, %s33
      %p35 = scmp.eq.s32.totalorder %s34, 0
      %s37 = sadd.s32 %s36, 1
      %s38 = scalar_select %p35, %s36, %s37
      %p41 = pneg %p35
      %p42 = scmp.eq.s32.totalorder %s12, 3
      %p43 = por %p41, %p42
      %p44 = scmp.ne.s32.totalorder %s36, %s39
      %p45 = scmp.eq.s32.totalorder %s12, 0
      %p46 = por %p44, %p45
      %p47 = scmp.ne.s32.totalorder %s36, %s39
      %p48 = scmp.eq.s32.totalorder %s17, 3
      %p49 = por %p47, %p48
      %p50 = scmp.ne.s32.totalorder %s39, %s40
      %p51 = scmp.eq.s32.totalorder %s17, 0
      %p52 = por %p50, %p51
      %p53 = scmp.ne.s32.totalorder %s39, %s40
      %p54 = scmp.eq.s32.totalorder %s18, 3
      %p55 = por %p53, %p54
      %p57 = scmp.ne.s32.totalorder %s40, %s56
      %p58 = scmp.eq.s32.totalorder %s18, 0
      %p59 = por %p57, %p58
      %s61 = sadd.s32 %s60, 1
      %p64 = scmp.eq.s32.totalorder %s12, 3
      %p65 = scmp.ne.s32.totalorder %s60, %s62
      %p66 = scmp.eq.s32.totalorder %s12, 0
      %p67 = por %p65, %p66
      %p68 = scmp.ne.s32.totalorder %s60, %s62
      %p69 = scmp.eq.s32.totalorder %s17, 3
      %p70 = por %p68, %p69
      %p71 = scmp.ne.s32.totalorder %s62, %s63
      %p72 = scmp.eq.s32.totalorder %s17, 0
      %p73 = por %p71, %p72
      %p74 = scmp.ne.s32.totalorder %s62, %s63
      %p75 = scmp.eq.s32.totalorder %s18, 3
      %p76 = por %p74, %p75
      %p78 = scmp.ne.s32.totalorder %s63, %s77
      %p79 = scmp.eq.s32.totalorder %s18, 0
      %p80 = por %p78, %p79
      %s82 = sadd.s32 %s81, 1
      %p85 = scmp.eq.s32.totalorder %s12, 3
      %p86 = scmp.ne.s32.totalorder %s81, %s83
      %p87 = scmp.eq.s32.totalorder %s12, 0
      %p88 = por %p86, %p87
      %p89 = scmp.ne.s32.totalorder %s81, %s83
      %p90 = scmp.eq.s32.totalorder %s17, 3
      %p91 = por %p89, %p90
      %p92 = scmp.ne.s32.totalorder %s83, %s84
      %p93 = scmp.eq.s32.totalorder %s17, 0
      %p94 = por %p92, %p93
      %p95 = scmp.ne.s32.totalorder %s83, %s84
      %p96 = scmp.eq.s32.totalorder %s18, 3
      %p97 = por %p95, %p96
      %p99 = scmp.ne.s32.totalorder %s84, %s98
      %p100 = scmp.eq.s32.totalorder %s18, 0
      %p101 = por %p99, %p100
      %s102 = ssub.s32 %s19, %s31
      %s103 = ssub.s32 %s20, %s27
      %s104 = sor.u32 %s102, %s103
      %p105 = scmp.eq.s32.totalorder %s104, 0
      %s107 = sadd.s32 %s106, 1
      %s108 = scalar_select %p105, %s106, %s107
      %p111 = pneg %p105
      %p112 = scmp.eq.s32.totalorder %s12, 3
      %p113 = por %p111, %p112
      %p114 = scmp.ne.s32.totalorder %s106, %s109
      %p115 = scmp.eq.s32.totalorder %s12, 0
      %p116 = por %p114, %p115
      %p117 = scmp.ne.s32.totalorder %s106, %s109
      %p118 = scmp.eq.s32.totalorder %s17, 3
      %p119 = por %p117, %p118
      %p120 = scmp.ne.s32.totalorder %s109, %s110
      %p121 = scmp.eq.s32.totalorder %s17, 0
      %p122 = por %p120, %p121
      %p123 = scmp.ne.s32.totalorder %s109, %s110
      %p124 = scmp.eq.s32.totalorder %s18, 3
      %p125 = por %p123, %p124
      %p127 = scmp.ne.s32.totalorder %s110, %s126
      %p128 = scmp.eq.s32.totalorder %s18, 0
      %p129 = por %p127, %p128
      %p130 = scmp.le.s32.totalorder 1, %s12
      %p131 = scmp.lt.s32.totalorder %s12, 5
      %p132 = pnand %p130, %p131
      %p133 = pneg %p132
      // Predicated region
      $region9: #{tpu_custom_call.1} parent=5 // pred_check
        _
      $region10: #{tpu_custom_call.1} parent=5 // pred_check_branch
        %135 = sbr.rel (%p132) target = $region12
      $region11: #{tpu_custom_call.1} parent=5 // pred_region
        %s136 = ssub.s32 %s12, 1
        // Predicated region
        $region13: #{tpu_custom_call.1} parent=11 // pred_check
          %p137 = pneg %p73
        $region14: #{tpu_custom_call.1} parent=11 // pred_check_branch
          %139 = sbr.rel (%p137) target = $region16
        $region15: #{tpu_custom_call.1} parent=11 // pred_region
          _
        $region16: #{tpu_custom_call.1} parent=11 // pred_fallthru
          _
        // Predicated region
        $region17: #{tpu_custom_call.1} parent=11 // pred_check
          %p140 = pneg %p94
        $region18: #{tpu_custom_call.1} parent=11 // pred_check_branch
          %142 = sbr.rel (%p140) target = $region20
        $region19: #{tpu_custom_call.1} parent=11 // pred_region
          _
        $region20: #{tpu_custom_call.1} parent=11 // pred_fallthru
          _
      $region12: #{tpu_custom_call.1} parent=5 // pred_fallthru
        _
      %p143 = scmp.lt.s32.totalorder %s12, 4
      // Predicated region
      $region21: #{tpu_custom_call.1} parent=5 // pred_check
        %p144 = pneg %p143
      $region22: #{tpu_custom_call.1} parent=5 // pred_check_branch
        %146 = sbr.rel (%p144) target = $region24
      $region23: #{tpu_custom_call.1} parent=5 // pred_region
        // Predicated region
        $region25: #{tpu_custom_call.1} parent=23 // pred_check
          %p147 = pneg %p46
        $region26: #{tpu_custom_call.1} parent=23 // pred_check_branch
          %149 = sbr.rel (%p147) target = $region28
        $region27: #{tpu_custom_call.1} parent=23 // pred_region
          %p150 = scmp.lt.s32.totalorder %s19, 1
          %s151 = scalar_select %p150, %s19, 1
          %p152 = scmp.lt.s32.totalorder %s20, 1
          %s153 = scalar_select %p152, %s20, 1
          %s154 = smul.addr %s151, 2
          %s155 = sadd.s32 %s153, %s154
          %s156 = smul.addr %s155, 4
          %s157 = scalar_lea.vmem %s0, %s156
        $region28: #{tpu_custom_call.1} parent=23 // pred_fallthru
          _
      $region24: #{tpu_custom_call.1} parent=5 // pred_fallthru
        _
      %p158 = scmp.le.s32.totalorder 1, %s12
      %p159 = scmp.lt.s32.totalorder %s12, 5
      %p160 = pnand %p158, %p159
      %p161 = pneg %p160
      // Predicated region
      $region29: #{tpu_custom_call.1} parent=5 // pred_check
        _
      $region30: #{tpu_custom_call.1} parent=5 // pred_check_branch
        %163 = sbr.rel (%p160) target = $region32
      $region31: #{tpu_custom_call.1} parent=5 // pred_region
        %s164 = ssub.s32 %s12, 1
        %p165 = scmp.lt.s32.totalorder %s21, 1
        %s166 = scalar_select %p165, %s21, 1
        %p167 = scmp.lt.s32.totalorder %s22, 1
        %s168 = scalar_select %p167, %s22, 1
        %s169 = smul.addr %s166, 2
        %s170 = sadd.s32 %s168, %s169
        %s171 = smul.addr %s170, 4
        %s172 = scalar_lea.vmem %s0, %s171
        %p173 = pneg %p52
        %p174 = pneg %p49
        %p175 = pneg %p73
        %p176 = pneg %p70
        %p177 = pneg %p94
        %p178 = pneg %p91
        %p179 = pneg %p122
        %p180 = pneg %p119
        %s181 = sand.u32 %s109, 1
        %s182 = scalar_lea.sflag [#allocation3], %s181
        %s183 = sand.u32 %s109, 1
        %s184 = smul.addr %s183, 8
        %s185 = scalar_lea.vmem [#allocation2], %s184
        %p186 = scmp.lt.s32.totalorder %s21, 1
        %s187 = scalar_select %p186, %s21, 1
        %p188 = scmp.lt.s32.totalorder %s22, 1
        %s189 = scalar_select %p188, %s22, 1
        %s190 = smul.addr %s187, 2
        %s191 = sadd.s32 %s189, %s190
        %s192 = smul.addr %s191, 4
        %s193 = scalar_lea.vmem %s0, %s192
        %v194 = vld [vmem:[%s1] sm:$0xff]
        %v195 = vld [vmem:[%s193] sm:$0xf]
        %v196 = vld [vmem:[%s2] sm:$0xff]
        %198 = vset.pattern.permute.xlu0 0
        %199 = vperm.xlu0 %198, %v196
        %v200 = vpop.permute.xlu0 %199
        %vm202 = vcmask 31744
        %v204 = vsel %vm202, %v194, 0
        %vm206 = vcmask 1043456
        %v208 = vsel %vm206, %v195, 0
        %210 = vmatpush.msra.mxu0 0.0
        %211 = vmatpush.msra.mxu0 0.0
        %212 = vmatpush.msra.mxu0 0.0
        %213 = vmatpush.msra.mxu0 0.0
        %214 = vmatpush.msra.mxu0 0.0
        %215 = vmatpush.msra.mxu0 0.0
        %216 = vmatpush.msra.mxu0 0.0
        %217 = vmatpush.msra.mxu0 0.0
        %218 = vmatpush.msra.mxu0 0.0
        %219 = vmatpush.msra.mxu0 0.0
        %220 = vmatpush.msra.mxu0 0.0
        %221 = vmatpush.msra.mxu0 0.0
        %222 = vmatpush.msra.mxu0 0.0
        %223 = vmatpush.msra.mxu0 0.0
        %224 = vmatpush.msra.mxu0 0.0
        %225 = vmatpush.msra.mxu0 %v208
        %226 = vmatmul.f32.gmra.mxu0 %v204
        %v227 = vpop.f32.mrf.mxu0
        %v228 = vadd.f32 %v200, %v227
        %229 = vdwg.mxu0
        %230 = vst [vmem:[%s185] sm:$0xff] %v228
        %s231 = sand.u32 %s109, 1
        %s232 = scalar_lea.sflag [#allocation3], %s231
        %s233 = sand.u32 %s109, 1
        %s234 = smul.addr %s233, 8
        %s235 = scalar_lea.vmem [#allocation2], %s234
        // Predicated region
        $region33: #{tpu_custom_call.1} parent=31 // pred_check
          %p236 = pneg %p119
        $region34: #{tpu_custom_call.1} parent=31 // pred_check_branch
          %238 = sbr.rel (%p236) target = $region36
        $region35: #{tpu_custom_call.1} parent=31 // pred_region
          %240 = vsyncadd %s232, 0
          %s241 = smul.addr %s21, 2
          %s242 = sadd.s32 %s22, %s241
          %s243 = smul.addr %s242, 8
          %s244 = scalar_lea.hbm %s3, %s243
          %s246 = sshll.u32 %s235, 4
          %s247 = int_to_ptr.vmem [resolvable:$true] %s246
          %s248 = sshll.u32 %s244, 4
          %s249 = int_to_ptr.hbm [resolvable:$true] %s248
          %251 = dma.vmem_to_hbm [thread:$0]  %s247, 128, %s249, %s232
        $region36: #{tpu_custom_call.1} parent=31 // pred_fallthru
          _
      $region32: #{tpu_custom_call.1} parent=5 // pred_fallthru
        _
      %p252 = scmp.le.s32.totalorder 2, %s12
      // Predicated region
      $region37: #{tpu_custom_call.1} parent=5 // pred_check
        %p253 = pneg %p252
      $region38: #{tpu_custom_call.1} parent=5 // pred_check_branch
        %255 = sbr.rel (%p253) target = $region40
      $region39: #{tpu_custom_call.1} parent=5 // pred_region
        %s256 = ssub.s32 %s12, 2
        // Predicated region
        $region41: #{tpu_custom_call.1} parent=39 // pred_check
          %p257 = pneg %p125
        $region42: #{tpu_custom_call.1} parent=39 // pred_check_branch
          %259 = sbr.rel (%p257) target = $region44
        $region43: #{tpu_custom_call.1} parent=39 // pred_region
          %s260 = sand.u32 %s110, 1
          %s261 = scalar_lea.sflag [#allocation3], %s260
          %s262 = sand.u32 %s110, 1
          %s263 = smul.addr %s262, 8
          %s264 = scalar_lea.vmem [#allocation2], %s263
          %266 = dma.done %s261, 128
        $region44: #{tpu_custom_call.1} parent=39 // pred_fallthru
          _
      $region40: #{tpu_custom_call.1} parent=5 // pred_fallthru
        _
    $region6: #{tpu_custom_call.1} parent=1 // loop_footer
      %s16 = sadd.s32 1, %s12
    $region7: #{tpu_custom_call.1} parent=1 // loop_footer_branch
      %11 = sbr.rel target = $region3
    $region8: #{tpu_custom_call.1} parent=1 // loop_exit
      _
    %267 = vsyncpa [#allocation3], 1
    %s268 = scalar_lea.sflag [#allocation3], 1
    %269 = vsyncpa %s268, 1

</llo_original>
